<compile_context>
chip_gen: v7x
topology: tpu7x:2x2x1
jax: 0.10.0
libtpu: 0.0.40
codegen_flags: <defaults>
</compile_context>

<pallas_src>
import jax
import jax.numpy as jnp
from jax.experimental import pallas as pl
from jax.experimental.pallas import tpu as pltpu

_LANE = 128
_SUBLANE = 8


def _sliding_window_sum(xp, k, out_elems, step):
    """Sliding-window sum along axis 1 of `xp`.

    out[..., e, ...] = sum_{i=0}^{k-1} xp[..., e + i*step, ...]   e in [0, out_elems)

    Binary-doubling formulation: the tile is read O(log2 k) times instead of k.
    All slices are static.  axis 1 is the lane axis for the flat (2-D) kernel
    (step = C) and the sublane/time axis for the channels-last kernel (step=1).
    """
    axis = 1
    total = xp.shape[axis]

    def sl(a, start, length):
        return jax.lax.slice_in_dim(a, start, start + length, axis=axis)

    acc = None
    cur = xp            # running partial sums of width `w` taps
    w = 1
    off = 0             # element offset already consumed by emitted parts
    rem = k
    while True:
        if rem & 1:
            part = sl(cur, off, out_elems)
            acc = part if acc is None else acc + part
            off += w * step
        rem >>= 1
        if rem == 0:
            break
        valid = total - (2 * w - 1) * step
        cur = sl(cur, 0, valid) + sl(cur, w * step, valid)
        w *= 2
    return acc


def _make_flat_kernel(k, pad, L, C):
    """C < 128 path: block is (bt, L*C); lanes are the flattened (time, chan) axis."""
    inv_k = 1.0 / k
    Lf = L * C

    def kernel(x_ref, res_ref, mean_ref):
        xf = x_ref[...].astype(jnp.float32)                 # (bt, L*C)
        if pad > 0:
            first = xf[:, 0:C]                               # x[:, 0, :]
            last = xf[:, Lf - C:Lf]                          # x[:, L-1, :]
            xp = jnp.concatenate([first] * pad + [xf] + [last] * pad, axis=1)
        else:
            xp = xf
        mean = _sliding_window_sum(xp, k, Lf, step=C) * inv_k
        mean_out = mean.astype(mean_ref.dtype)
        mean_ref[...] = mean_out
        # Subtract in the model dtype (matches PyTorch op order); xf round-trip
        # cast is exact, so x_ref is not re-read.
        res_ref[...] = xf.astype(res_ref.dtype) - mean_out

    return kernel


def _make_cl_kernel(k, pad, L):
    """C >= 128 path: block is (bt, L, ct); window runs along the sublane axis."""
    inv_k = 1.0 / k

    def kernel(x_ref, res_ref, mean_ref):
        xf = x_ref[...].astype(jnp.float32)                  # (bt, L, ct)
        if pad > 0:
            bt, _, ct = xf.shape
            front = jnp.broadcast_to(xf[:, 0:1, :], (bt, pad, ct))
            end = jnp.broadcast_to(xf[:, L - 1:L, :], (bt, pad, ct))
            xp = jnp.concatenate([front, xf, end], axis=1)
        else:
            xp = xf
        mean = _sliding_window_sum(xp, k, L, step=1) * inv_k
        mean_out = mean.astype(mean_ref.dtype)
        mean_ref[...] = mean_out
        res_ref[...] = xf.astype(res_ref.dtype) - mean_out

    return kernel


def _vmem_limits():
    """Generation-aware VMEM limit / per-step budget (v7x: 64 MiB, v5e/v6e: 128 MiB)."""
    cap = 64 * 1024 * 1024                      # conservative fallback
    try:
        info = pltpu.get_tpu_info()
        cap = int(getattr(info, "vmem_capacity_bytes", cap) or cap)
    except Exception:
        pass
    limit = int(cap * 0.75)                     # explicit scoped limit for this kernel
    budget = int(limit * 0.80)                  # what the tile-size estimate may consume
    return limit, budget


def _pick_batch_tile(B, per_row_bytes, budget, min_steps, sublane_align):
    bt_cap = max(1, budget // max(per_row_bytes, 1))
    bt_steps = max(1, -(-B // min_steps))       # largest bt giving ~min_steps grid steps
    bt = int(min(B, bt_cap, bt_steps))
    if sublane_align and bt < B:
        # block's second-to-last dim must be a multiple of 8 (or the full dim)
        bt = max(_SUBLANE, (bt // _SUBLANE) * _SUBLANE)
        bt = min(bt, B)
        if bt % _SUBLANE != 0:                  # only possible when B < 8
            bt = B
    return max(1, bt)


def _pick_channel_tile(C, L, itemsize, budget):
    per_elem = 3 * 2 * itemsize + 6 * 4         # dbl-buffered I/O blocks + f32 temps
    ct_cap = max(_LANE, budget // max(L * per_elem, 1))
    ct = min(C, 2 * _LANE, ct_cap)
    ct = max(_LANE, (ct // _LANE) * _LANE)      # lane-dense multiple of 128
    return min(ct, C)


def series_decomp(x, kernel_size, *, block_b=None, block_c=None):
    """x: (B, L, C) float array. Returns (res, moving_mean), each (B, L, C)."""
    B, L, C = x.shape
    if kernel_size < 1:
        raise ValueError("kernel_size must be >= 1")
    if kernel_size % 2 == 0:
        raise ValueError(
            "series_decomp requires an odd kernel_size: the PyTorch module's "
            "(k-1)//2 replicate padding only matches AvgPool1d output length "
            "for odd k.")
    k = kernel_size
    pad = (k - 1) // 2
    itemsize = x.dtype.itemsize
    vmem_limit, budget = _vmem_limits()
    per_elem = 3 * 2 * itemsize + 6 * 4          # dbl-buffered I/O blocks + f32 temps

    if C < _LANE:
        # ---- lane-dense flat path: view (B, L, C) as (B, L*C), a free reshape ----
        Lf = L * C
        x2 = x.reshape(B, Lf)
        bt = block_b if block_b is not None else _pick_batch_tile(
            B, Lf * per_elem, budget, min_steps=8, sublane_align=True)
        grid = (pl.cdiv(B, bt),)
        blk = (bt, Lf)
        idx = lambda b: (b, 0)
        res2, mean2 = pl.pallas_call(
            _make_flat_kernel(k, pad, L, C),
            out_shape=(jax.ShapeDtypeStruct((B, Lf), x.dtype),
                       jax.ShapeDtypeStruct((B, Lf), x.dtype)),
            grid_spec=pltpu.PrefetchScalarGridSpec(
                num_scalar_prefetch=0,
                grid=grid,
                in_specs=[pl.BlockSpec(blk, idx)],
                out_specs=[pl.BlockSpec(blk, idx), pl.BlockSpec(blk, idx)],
            ),
            compiler_params=pltpu.CompilerParams(
                dimension_semantics=("parallel",),
                vmem_limit_bytes=vmem_limit,
            ),
        )(x2)
        return res2.reshape(B, L, C), mean2.reshape(B, L, C)

    # ---- channels-last path (C >= 128: lane axis already dense) ----
    ct = block_c if block_c is not None else _pick_channel_tile(C, L, itemsize, budget)
    bt = block_b if block_b is not None else _pick_batch_tile(
        B, L * ct * per_elem, budget, min_steps=4, sublane_align=False)
    grid = (pl.cdiv(B, bt), pl.cdiv(C, ct))
    blk = (bt, L, ct)
    idx = lambda b, c: (b, 0, c)
    res, mean = pl.pallas_call(
        _make_cl_kernel(k, pad, L),
        out_shape=(jax.ShapeDtypeStruct((B, L, C), x.dtype),
                   jax.ShapeDtypeStruct((B, L, C), x.dtype)),
        grid_spec=pltpu.PrefetchScalarGridSpec(
            num_scalar_prefetch=0,
            grid=grid,
            in_specs=[pl.BlockSpec(blk, idx)],
            out_specs=[pl.BlockSpec(blk, idx), pl.BlockSpec(blk, idx)],
        ),
        compiler_params=pltpu.CompilerParams(
            dimension_semantics=("parallel", "parallel"),
            vmem_limit_bytes=vmem_limit,
        ),
    )(x)
    return res, mean


def _reference(x, kernel_size):
    """Pure-JAX reference replicating the PyTorch semantics."""
    pad = (kernel_size - 1) // 2
    front = jnp.repeat(x[:, 0:1, :], pad, axis=1)
    end = jnp.repeat(x[:, -1:, :], pad, axis=1)
    xp = jnp.concatenate([front, x, end], axis=1)
    L = x.shape[1]
    windows = jnp.stack([xp[:, i:i + L, :] for i in range(kernel_size)], axis=0)
    mean = jnp.mean(windows, axis=0)
    return x - mean, mean


if __name__ == "__main__":
    key = jax.random.PRNGKey(0)
    k1, k2 = jax.random.split(key)

    # Config 1: DSSRNN-style shape (small channel count, k=25).
    # Exercises the lane-dense flat (B, L*C) path: L*C = 768 lanes.
    x1 = jax.random.normal(k1, (2, 96, 8), dtype=jnp.float32)
    res1, mean1 = series_decomp(x1, 25)
    jax.block_until_ready((res1, mean1))
    r1_ref, m1_ref = _reference(x1, 25)
    assert jnp.allclose(mean1, m1_ref, atol=1e-5, rtol=1e-5)
    assert jnp.allclose(res1, r1_ref, atol=1e-5, rtol=1e-5)

    # Config 2: wide channel count -- exercises the channels-last path with a
    # lane-dense 128-wide channel tile and a 2-D parallel grid.
    x2 = jax.random.normal(k2, (2, 64, 256), dtype=jnp.float32)
    res2, mean2 = series_decomp(x2, 5, block_b=1, block_c=128)
    jax.block_until_ready((res2, mean2))
    r2_ref, m2_ref = _reference(x2, 5)
    assert jnp.allclose(mean2, m2_ref, atol=1e-5, rtol=1e-5)
    assert jnp.allclose(res2, r2_ref, atol=1e-5, rtol=1e-5)

    print("KERNEL_OK")
</pallas_src>

<mosaic_0001>
module attributes {stable_mosaic.version = 11 : i64} {
  func.func @kernel(%arg0: i32, %arg1: memref<2x768xf32, #tpu.memory_space<vmem>>, %arg2: memref<2x768xf32, #tpu.memory_space<vmem>>, %arg3: memref<2x768xf32, #tpu.memory_space<vmem>>) attributes {dimension_semantics = [#tpu.dimension_semantics<parallel>], iteration_bounds = array<i64: 1>, scalar_prefetch = 0 : i64, scratch_operands = 0 : i64, tpu.core_type = #tpu.core_type<tc>, window_params = [{transform_indices = @transform_0, window_bounds = array<i64: 2, 768>}, {transform_indices = @transform_1, window_bounds = array<i64: 2, 768>}, {transform_indices = @transform_2, window_bounds = array<i64: 2, 768>}]} {
    %c0 = arith.constant 0 : index
    %c0_0 = arith.constant 0 : index
    %0 = vector.load %arg1[%c0, %c0_0] : memref<2x768xf32, #tpu.memory_space<vmem>>, vector<2x768xf32>
    %1 = vector.extract_strided_slice %0 {offsets = [0, 0], sizes = [2, 8], strides = [1, 1]} : vector<2x768xf32> to vector<2x8xf32>
    %2 = vector.extract_strided_slice %0 {offsets = [0, 760], sizes = [2, 8], strides = [1, 1]} : vector<2x768xf32> to vector<2x8xf32>
    %3 = tpu.concatenate %1, %1, %1, %1, %1, %1, %1, %1, %1, %1, %1, %1, %0, %2, %2, %2 in 1 : vector<2x8xf32>, vector<2x8xf32>, vector<2x8xf32>, vector<2x8xf32>, vector<2x8xf32>, vector<2x8xf32>, vector<2x8xf32>, vector<2x8xf32>, vector<2x8xf32>, vector<2x8xf32>, vector<2x8xf32>, vector<2x8xf32>, vector<2x768xf32>, vector<2x8xf32>, vector<2x8xf32>, vector<2x8xf32> -> vector<2x888xf32>
    %4 = tpu.concatenate %2, %2, %2, %2, %2, %2, %2, %2, %2 in 1 : vector<2x8xf32>, vector<2x8xf32>, vector<2x8xf32>, vector<2x8xf32>, vector<2x8xf32>, vector<2x8xf32>, vector<2x8xf32>, vector<2x8xf32>, vector<2x8xf32> -> vector<2x72xf32>
    %5 = tpu.concatenate %3, %4 in 1 : vector<2x888xf32>, vector<2x72xf32> -> vector<2x960xf32>
    %6 = vector.extract_strided_slice %5 {offsets = [0, 0], sizes = [2, 768], strides = [1, 1]} : vector<2x960xf32> to vector<2x768xf32>
    %7 = vector.extract_strided_slice %5 {offsets = [0, 0], sizes = [2, 952], strides = [1, 1]} : vector<2x960xf32> to vector<2x952xf32>
    %8 = vector.extract_strided_slice %5 {offsets = [0, 8], sizes = [2, 952], strides = [1, 1]} : vector<2x960xf32> to vector<2x952xf32>
    %9 = arith.addf %7, %8 : vector<2x952xf32>
    %10 = vector.extract_strided_slice %9 {offsets = [0, 0], sizes = [2, 936], strides = [1, 1]} : vector<2x952xf32> to vector<2x936xf32>
    %11 = vector.extract_strided_slice %9 {offsets = [0, 16], sizes = [2, 936], strides = [1, 1]} : vector<2x952xf32> to vector<2x936xf32>
    %12 = arith.addf %10, %11 : vector<2x936xf32>
    %13 = vector.extract_strided_slice %12 {offsets = [0, 0], sizes = [2, 904], strides = [1, 1]} : vector<2x936xf32> to vector<2x904xf32>
    %14 = vector.extract_strided_slice %12 {offsets = [0, 32], sizes = [2, 904], strides = [1, 1]} : vector<2x936xf32> to vector<2x904xf32>
    %15 = arith.addf %13, %14 : vector<2x904xf32>
    %16 = vector.extract_strided_slice %15 {offsets = [0, 8], sizes = [2, 768], strides = [1, 1]} : vector<2x904xf32> to vector<2x768xf32>
    %17 = arith.addf %6, %16 : vector<2x768xf32>
    %18 = vector.extract_strided_slice %15 {offsets = [0, 0], sizes = [2, 840], strides = [1, 1]} : vector<2x904xf32> to vector<2x840xf32>
    %19 = vector.extract_strided_slice %15 {offsets = [0, 64], sizes = [2, 840], strides = [1, 1]} : vector<2x904xf32> to vector<2x840xf32>
    %20 = arith.addf %18, %19 : vector<2x840xf32>
    %21 = vector.extract_strided_slice %20 {offsets = [0, 72], sizes = [2, 768], strides = [1, 1]} : vector<2x840xf32> to vector<2x768xf32>
    %22 = arith.addf %17, %21 : vector<2x768xf32>
    %cst = arith.constant 4.000000e-02 : f32
    %23 = vector.broadcast %cst : f32 to vector<2x768xf32>
    %24 = arith.mulf %22, %23 : vector<2x768xf32>
    %c0_1 = arith.constant 0 : index
    %c0_2 = arith.constant 0 : index
    %25 = vector.load %arg3[%c0_1, %c0_2] : memref<2x768xf32, #tpu.memory_space<vmem>>, vector<2x768xf32>
    tpu.vector_store %arg3[%c0_1, %c0_2], %24 {strides = array<i32>} : memref<2x768xf32, #tpu.memory_space<vmem>>, vector<2x768xf32>,
    %26 = arith.subf %0, %24 : vector<2x768xf32>
    %c0_3 = arith.constant 0 : index
    %c0_4 = arith.constant 0 : index
    %27 = vector.load %arg2[%c0_3, %c0_4] : memref<2x768xf32, #tpu.memory_space<vmem>>, vector<2x768xf32>
    tpu.vector_store %arg2[%c0_3, %c0_4], %26 {strides = array<i32>} : memref<2x768xf32, #tpu.memory_space<vmem>>, vector<2x768xf32>,
    return
  }
  func.func @transform_0(%arg0: i32) -> (i32, i32) {
    %c0_i32 = arith.constant 0 : i32
    %c0_i32_0 = arith.constant 0 : i32
    return %arg0, %c0_i32 : i32, i32
  }
  func.func @transform_1(%arg0: i32) -> (i32, i32) {
    %c0_i32 = arith.constant 0 : i32
    %c0_i32_0 = arith.constant 0 : i32
    return %arg0, %c0_i32 : i32, i32
  }
  func.func @transform_2(%arg0: i32) -> (i32, i32) {
    %c0_i32 = arith.constant 0 : i32
    %c0_i32_0 = arith.constant 0 : i32
    return %arg0, %c0_i32 : i32, i32
  }
}

</mosaic_0001>

<llo_original>
// kernel: tpu_custom_call.1
$region0: #{tpu_custom_call.1}
  #allocation0 [shape = 'u32[]', space=smem, size = 0x4, offset = 0x4, fixed_abs, tag = 'smem constant byte address 0x4 - core index']
  #allocation1 [shape = 'u32[144,128]{1,0:T(1,128)}', space=vmem, size = 0x12000, scoped, tag = 'internal scratch']
  %s0 = inlined_call_operand.hbm [shape: f32[2,768], index: 0, kind: input, shape index: {}]
  %s1 = inlined_call_operand.hbm [shape: f32[2,768], index: 1, kind: output, shape index: {0}]
  %s2 = inlined_call_operand.hbm [shape: f32[2,768], index: 2, kind: output, shape index: {1}]
  %3 = xla_tuple %s1, %s2
  %s4 = sld [smem:[#allocation0]]
  $region26: #{tpu_custom_call.1} parent=0
    _
  %s6 = ssub.s32 1, %s4
  %s7 = scalar_select 0, %s6, %s4
  $region1: #{tpu_custom_call.1} parent=0
    #allocation2 [shape = 'u8[6144]{0}', space=vmem, size = 0x1800, scoped, tag = 'input window, operand 0, single buffered']
    #allocation3 [shape = 's32[1]{0}', space=sflag, size = 0x4, scoped, tag = 'scoped memory for tpu_custom_call.1']
    #allocation4 [shape = 's32[1]{0}', space=sflag, size = 0x4, scoped, tag = 'scoped memory for tpu_custom_call.1']
    #allocation5 [shape = 'u8[6144]{0}', space=vmem, size = 0x1800, scoped, tag = 'output window, operand 0, single buffered']
    #allocation6 [shape = 'u8[6144]{0}', space=vmem, size = 0x1800, scoped, tag = 'output window, operand 1, single buffered']
    #allocation7 [shape = 's32[1]{0}', space=sflag, size = 0x4, scoped, tag = 'scoped memory for tpu_custom_call.1']
    %8 = vsyncpa [#allocation3], 0
    %9 = vsyncpa [#allocation4], 0
    %10 = vsyncpa [#allocation7], 0
    // Predicated region
    $region2: #{tpu_custom_call.1} parent=1 // pred_check
      _
    $region3: #{tpu_custom_call.1} parent=1 // pred_check_branch
      %12 = sbr.rel (0) target = $region5
    $region4: #{tpu_custom_call.1} parent=1 // pred_region
      %s14 = ssub.s32 192, 192
      %15 = vsyncadd [#allocation3], %s14
      %s17 = sshll.u32 [#allocation2], 4
      %s18 = int_to_ptr.vmem [resolvable:$true] %s17
      %20 = dma.hbm_to_vmem [thread:$0]  %s0, 192, %s18, [#allocation3]
    $region5: #{tpu_custom_call.1} parent=1 // pred_fallthru
      _
    // Predicated region
    $region6: #{tpu_custom_call.1} parent=1 // pred_check
      _
    $region7: #{tpu_custom_call.1} parent=1 // pred_check_branch
      %22 = sbr.rel (0) target = $region9
    $region8: #{tpu_custom_call.1} parent=1 // pred_region
      %23 = dma.done [#allocation3], 192
    $region9: #{tpu_custom_call.1} parent=1 // pred_fallthru
      _
    %v24 = vld [vmem:[#allocation2] sm:$0xff]
    %v25 = vld [vmem:[#allocation2 + $0x8] sm:$0xf]
    %v28 = vunpack.c.l.s4 1983009808
    %v29 = vunpack.c.0.s8 %v28
    %v30 = vlaneseq
    %v31 = vshrl.u32 %v30, 7
    %v32 = vsub.s32 %v29, %v31
    %v33 = vrot.slane %v24, %v32
    %34 = vrot.lane.b32.xlu0 %v33, 8
    %v35 = vpop.permute.xlu0 %34
    %37 = vrot.lane.b32.xlu0 %v33, 16
    %v38 = vpop.permute.xlu0 %37
    %40 = vrot.lane.b32.xlu0 %v33, 24
    %v41 = vpop.permute.xlu0 %40
    %43 = vrot.lane.b32.xlu0 %v33, 32
    %v44 = vpop.permute.xlu0 %43
    %46 = vrot.lane.b32.xlu0 %v33, 40
    %v47 = vpop.permute.xlu0 %46
    %49 = vrot.lane.b32.xlu0 %v33, 48
    %v50 = vpop.permute.xlu0 %49
    %52 = vrot.lane.b32.xlu0 %v33, 56
    %v53 = vpop.permute.xlu0 %52
    %55 = vrot.lane.b32.xlu0 %v33, 64
    %v56 = vpop.permute.xlu0 %55
    %58 = vrot.lane.b32.xlu0 %v33, 72
    %v59 = vpop.permute.xlu0 %58
    %61 = vrot.lane.b32.xlu0 %v33, 80
    %v62 = vpop.permute.xlu0 %61
    %64 = vrot.lane.b32.xlu0 %v33, 88
    %v65 = vpop.permute.xlu0 %64
    %v68 = vcombine.high %v24, %v24
    %v70 = vunpack.c.l.s4 1983009808
    %v71 = vunpack.c.0.s8 %v70
    %v72 = vlaneseq
    %v73 = vshrl.u32 %v72, 7
    %v74 = vsub.s32 %v71, %v73
    %v75 = vrot.slane %v68, %v74
    %v76 = vcombine.high %v33, %v33
    %v77 = vcombine.high %v75, %v75
    %v79 = vunpack.c.l.s4 1983009808
    %v80 = vunpack.c.0.s8 %v79
    %v81 = vlaneseq
    %v82 = vshrl.u32 %v81, 7
    %v83 = vsub.s32 %v80, %v82
    %v84 = vrot.slane %v25, %v83
    %v85 = vcombine.high %v84, %v84
    %86 = vrot.lane.b32.xlu0 %v33, 96
    %v87 = vpop.permute.xlu0 %86
    %88 = vrot.lane.b32.xlu0 %v76, 96
    %v89 = vpop.permute.xlu0 %88
    %90 = vrot.lane.b32.xlu0 %v75, 96
    %v91 = vpop.permute.xlu0 %90
    %92 = vrot.lane.b32.xlu0 %v77, 96
    %v93 = vpop.permute.xlu0 %92
    %94 = vrot.lane.b32.xlu0 %v84, 96
    %v95 = vpop.permute.xlu0 %94
    %96 = vrot.lane.b32.xlu0 %v85, 96
    %v97 = vpop.permute.xlu0 %96
    %vm98 = vcmask 785408
    %v99 = vsel %vm98, %v87, %v89
    %v100 = vsel %vm98, %v89, %v91
    %v101 = vsel %vm98, %v91, %v93
    %v102 = vsel %vm98, %v93, %v95
    %v103 = vsel %vm98, %v95, %v97
    %111 = vrot.lane.b32.xlu0 %v85, 104
    %v112 = vpop.permute.xlu0 %111
    %114 = vrot.lane.b32.xlu0 %v85, 112
    %v115 = vpop.permute.xlu0 %114
    %117 = vrot.lane.b32.xlu0 %v85, 120
    %v118 = vpop.permute.xlu0 %117
    %vm120 = vcmask 64512
    %v121 = vsel %vm120, %v24, %v35
    %vm122 = vcmask 130048
    %v123 = vsel %vm122, %v121, %v38
    %vm124 = vcmask 195584
    %v125 = vsel %vm124, %v123, %v41
    %vm126 = vcmask 261120
    %v127 = vsel %vm126, %v125, %v44
    %vm128 = vcmask 326656
    %v129 = vsel %vm128, %v127, %v47
    %vm130 = vcmask 392192
    %v131 = vsel %vm130, %v129, %v50
    %vm132 = vcmask 457728
    %v133 = vsel %vm132, %v131, %v53
    %vm134 = vcmask 523264
    %v135 = vsel %vm134, %v133, %v56
    %vm136 = vcmask 588800
    %v137 = vsel %vm136, %v135, %v59
    %vm138 = vcmask 654336
    %v139 = vsel %vm138, %v137, %v62
    %vm140 = vcmask 719872
    %v141 = vsel %vm140, %v139, %v65
    %v142 = vsel %vm98, %v141, %v87
    %v143 = vsel %vm98, %v97, %v112
    %vm144 = vcmask 850944
    %v145 = vsel %vm144, %v143, %v115
    %vm146 = vcmask 916480
    %v147 = vsel %vm146, %v145, %v118
    %148 = vrot.lane.b32.xlu0 %v85, 8
    %v149 = vpop.permute.xlu0 %148
    %151 = vrot.lane.b32.xlu0 %v85, 16
    %v152 = vpop.permute.xlu0 %151
    %154 = vrot.lane.b32.xlu0 %v85, 24
    %v155 = vpop.permute.xlu0 %154
    %157 = vrot.lane.b32.xlu0 %v85, 32
    %v158 = vpop.permute.xlu0 %157
    %160 = vrot.lane.b32.xlu0 %v85, 40
    %v161 = vpop.permute.xlu0 %160
    %163 = vrot.lane.b32.xlu0 %v85, 48
    %v164 = vpop.permute.xlu0 %163
    %166 = vrot.lane.b32.xlu0 %v85, 56
    %v167 = vpop.permute.xlu0 %166
    %169 = vrot.lane.b32.xlu0 %v85, 64
    %v170 = vpop.permute.xlu0 %169
    %172 = vrot.lane.b32.xlu0 %v85, 72
    %v173 = vpop.permute.xlu0 %172
    %v175 = vsel %vm120, %v149, %v152
    %v176 = vsel %vm122, %v175, %v155
    %v177 = vsel %vm124, %v176, %v158
    %v178 = vsel %vm126, %v177, %v161
    %v179 = vsel %vm128, %v178, %v164
    %v180 = vsel %vm130, %v179, %v167
    %v181 = vsel %vm132, %v180, %v170
    %v182 = vsel %vm134, %v181, %v173
    %184 = vrot.lane.b32.xlu0 %v182, 120
    %v185 = vpop.permute.xlu0 %184
    %vm187 = vcmask 982016
    %v188 = vsel %vm187, %v147, %v185
    %191 = vrot.lane.b32.xlu0 %v142, 120
    %v192 = vpop.permute.xlu0 %191
    %193 = vrot.lane.b32.xlu0 %v99, 120
    %v194 = vpop.permute.xlu0 %193
    %195 = vrot.lane.b32.xlu0 %v100, 120
    %v196 = vpop.permute.xlu0 %195
    %197 = vrot.lane.b32.xlu0 %v101, 120
    %v198 = vpop.permute.xlu0 %197
    %199 = vrot.lane.b32.xlu0 %v102, 120
    %v200 = vpop.permute.xlu0 %199
    %201 = vrot.lane.b32.xlu0 %v103, 120
    %v202 = vpop.permute.xlu0 %201
    %203 = vrot.lane.b32.xlu0 %v188, 120
    %v204 = vpop.permute.xlu0 %203
    %205 = vrot.lane.b32.xlu0 %v185, 120
    %v206 = vpop.permute.xlu0 %205
    %v207 = vsel %vm187, %v192, %v194
    %v208 = vsel %vm187, %v194, %v196
    %v209 = vsel %vm187, %v196, %v198
    %v210 = vsel %vm187, %v198, %v200
    %v211 = vsel %vm187, %v200, %v202
    %v212 = vsel %vm187, %v202, %v204
    %v213 = vsel %vm187, %v204, %v206
    %v222 = vadd.f32 %v142, %v207
    %v223 = vadd.f32 %v99, %v208
    %v224 = vadd.f32 %v100, %v209
    %v225 = vadd.f32 %v101, %v210
    %v226 = vadd.f32 %v102, %v211
    %v227 = vadd.f32 %v103, %v212
    %v228 = vadd.f32 %v188, %v213
    %v229 = vadd.f32 %v185, %v206
    %238 = vrot.lane.b32.xlu0 %v222, 112
    %v239 = vpop.permute.xlu0 %238
    %240 = vrot.lane.b32.xlu0 %v223, 112
    %v241 = vpop.permute.xlu0 %240
    %242 = vrot.lane.b32.xlu0 %v224, 112
    %v243 = vpop.permute.xlu0 %242
    %244 = vrot.lane.b32.xlu0 %v225, 112
    %v245 = vpop.permute.xlu0 %244
    %246 = vrot.lane.b32.xlu0 %v226, 112
    %v247 = vpop.permute.xlu0 %246
    %248 = vrot.lane.b32.xlu0 %v227, 112
    %v249 = vpop.permute.xlu0 %248
    %250 = vrot.lane.b32.xlu0 %v228, 112
    %v251 = vpop.permute.xlu0 %250
    %252 = vrot.lane.b32.xlu0 %v229, 112
    %v253 = vpop.permute.xlu0 %252
    %v254 = vsel %vm146, %v239, %v241
    %v255 = vsel %vm146, %v241, %v243
    %v256 = vsel %vm146, %v243, %v245
    %v257 = vsel %vm146, %v245, %v247
    %v258 = vsel %vm146, %v247, %v249
    %v259 = vsel %vm146, %v249, %v251
    %v260 = vsel %vm146, %v251, %v253
    %v269 = vadd.f32 %v222, %v254
    %v270 = vadd.f32 %v223, %v255
    %v271 = vadd.f32 %v224, %v256
    %v272 = vadd.f32 %v225, %v257
    %v273 = vadd.f32 %v226, %v258
    %v274 = vadd.f32 %v227, %v259
    %v275 = vadd.f32 %v228, %v260
    %v276 = vadd.f32 %v229, %v253
    %285 = vrot.lane.b32.xlu0 %v269, 96
    %v286 = vpop.permute.xlu0 %285
    %287 = vrot.lane.b32.xlu0 %v270, 96
    %v288 = vpop.permute.xlu0 %287
    %289 = vrot.lane.b32.xlu0 %v271, 96
    %v290 = vpop.permute.xlu0 %289
    %291 = vrot.lane.b32.xlu0 %v272, 96
    %v292 = vpop.permute.xlu0 %291
    %293 = vrot.lane.b32.xlu0 %v273, 96
    %v294 = vpop.permute.xlu0 %293
    %295 = vrot.lane.b32.xlu0 %v274, 96
    %v296 = vpop.permute.xlu0 %295
    %297 = vrot.lane.b32.xlu0 %v275, 96
    %v298 = vpop.permute.xlu0 %297
    %299 = vrot.lane.b32.xlu0 %v276, 96
    %v300 = vpop.permute.xlu0 %299
    %v301 = vsel %vm98, %v286, %v288
    %v302 = vsel %vm98, %v288, %v290
    %v303 = vsel %vm98, %v290, %v292
    %v304 = vsel %vm98, %v292, %v294
    %v305 = vsel %vm98, %v294, %v296
    %v306 = vsel %vm98, %v296, %v298
    %v307 = vsel %vm98, %v298, %v300
    %v316 = vadd.f32 %v269, %v301
    %v317 = vadd.f32 %v270, %v302
    %v318 = vadd.f32 %v271, %v303
    %v319 = vadd.f32 %v272, %v304
    %v320 = vadd.f32 %v273, %v305
    %v321 = vadd.f32 %v274, %v306
    %v322 = vadd.f32 %v275, %v307
    %v323 = vadd.f32 %v276, %v300
    %331 = vrot.lane.b32.xlu0 %v316, 120
    %v332 = vpop.permute.xlu0 %331
    %333 = vrot.lane.b32.xlu0 %v317, 120
    %v334 = vpop.permute.xlu0 %333
    %335 = vrot.lane.b32.xlu0 %v318, 120
    %v336 = vpop.permute.xlu0 %335
    %337 = vrot.lane.b32.xlu0 %v319, 120
    %v338 = vpop.permute.xlu0 %337
    %339 = vrot.lane.b32.xlu0 %v320, 120
    %v340 = vpop.permute.xlu0 %339
    %341 = vrot.lane.b32.xlu0 %v321, 120
    %v342 = vpop.permute.xlu0 %341
    %343 = vrot.lane.b32.xlu0 %v322, 120
    %v344 = vpop.permute.xlu0 %343
    %v345 = vsel %vm187, %v332, %v334
    %v346 = vsel %vm187, %v334, %v336
    %v347 = vsel %vm187, %v336, %v338
    %v348 = vsel %vm187, %v338, %v340
    %v349 = vsel %vm187, %v340, %v342
    %v350 = vsel %vm187, %v342, %v344
    %v357 = vadd.f32 %v142, %v345
    %v358 = vadd.f32 %v99, %v346
    %v359 = vadd.f32 %v100, %v347
    %v360 = vadd.f32 %v101, %v348
    %v361 = vadd.f32 %v102, %v349
    %v362 = vadd.f32 %v103, %v350
    %364 = vrot.lane.b32.xlu0 %v316, 64
    %v365 = vpop.permute.xlu0 %364
    %366 = vrot.lane.b32.xlu0 %v317, 64
    %v367 = vpop.permute.xlu0 %366
    %368 = vrot.lane.b32.xlu0 %v318, 64
    %v369 = vpop.permute.xlu0 %368
    %370 = vrot.lane.b32.xlu0 %v319, 64
    %v371 = vpop.permute.xlu0 %370
    %372 = vrot.lane.b32.xlu0 %v320, 64
    %v373 = vpop.permute.xlu0 %372
    %374 = vrot.lane.b32.xlu0 %v321, 64
    %v375 = vpop.permute.xlu0 %374
    %376 = vrot.lane.b32.xlu0 %v322, 64
    %v377 = vpop.permute.xlu0 %376
    %378 = vrot.lane.b32.xlu0 %v323, 64
    %v379 = vpop.permute.xlu0 %378
    %v380 = vsel %vm134, %v365, %v367
    %v381 = vsel %vm134, %v367, %v369
    %v382 = vsel %vm134, %v369, %v371
    %v383 = vsel %vm134, %v371, %v373
    %v384 = vsel %vm134, %v373, %v375
    %v385 = vsel %vm134, %v375, %v377
    %v386 = vsel %vm134, %v377, %v379
    %v394 = vadd.f32 %v316, %v380
    %v395 = vadd.f32 %v317, %v381
    %v396 = vadd.f32 %v318, %v382
    %v397 = vadd.f32 %v319, %v383
    %v398 = vadd.f32 %v320, %v384
    %v399 = vadd.f32 %v321, %v385
    %v400 = vadd.f32 %v322, %v386
    %408 = vrot.lane.b32.xlu0 %v394, 56
    %v409 = vpop.permute.xlu0 %408
    %410 = vrot.lane.b32.xlu0 %v395, 56
    %v411 = vpop.permute.xlu0 %410
    %412 = vrot.lane.b32.xlu0 %v396, 56
    %v413 = vpop.permute.xlu0 %412
    %414 = vrot.lane.b32.xlu0 %v397, 56
    %v415 = vpop.permute.xlu0 %414
    %416 = vrot.lane.b32.xlu0 %v398, 56
    %v417 = vpop.permute.xlu0 %416
    %418 = vrot.lane.b32.xlu0 %v399, 56
    %v419 = vpop.permute.xlu0 %418
    %420 = vrot.lane.b32.xlu0 %v400, 56
    %v421 = vpop.permute.xlu0 %420
    %v422 = vsel %vm132, %v409, %v411
    %v423 = vsel %vm132, %v411, %v413
    %v424 = vsel %vm132, %v413, %v415
    %v425 = vsel %vm132, %v415, %v417
    %v426 = vsel %vm132, %v417, %v419
    %v427 = vsel %vm132, %v419, %v421
    %v434 = vadd.f32 %v357, %v422
    %v435 = vadd.f32 %v358, %v423
    %v436 = vadd.f32 %v359, %v424
    %v437 = vadd.f32 %v360, %v425
    %v438 = vadd.f32 %v361, %v426
    %v439 = vadd.f32 %v362, %v427
    %v440 = vmul.f32 %v434, 0.04
    %v441 = vmul.f32 %v435, 0.04
    %v442 = vmul.f32 %v436, 0.04
    %v443 = vmul.f32 %v437, 0.04
    %v444 = vmul.f32 %v438, 0.04
    %v445 = vmul.f32 %v439, 0.04
    %v452 = vcombine.low %v440, %v441
    %v453 = vcombine.low %v442, %v443
    %v455 = vunpack.c.l.s4 1983009808
    %v456 = vunpack.c.0.s8 %v455
    %v457 = vlaneseq
    %v458 = vshrl.u32 %v457, 7
    %v459 = vsub.s32 %v456, %v458
    %v460 = vrot.slane %v452, %v459
    %v462 = vunpack.c.l.s4 1983009808
    %v463 = vunpack.c.0.s8 %v462
    %v464 = vlaneseq
    %v465 = vshrl.u32 %v464, 7
    %v466 = vsub.s32 %v463, %v465
    %v467 = vrot.slane %v453, %v466
    %v468 = vcombine.low %v460, %v467
    %v469 = vcombine.low %v444, %v445
    %v471 = vunpack.c.l.s4 1983009808
    %v472 = vunpack.c.0.s8 %v471
    %v473 = vlaneseq
    %v474 = vshrl.u32 %v473, 7
    %v475 = vsub.s32 %v472, %v474
    %v476 = vrot.slane %v469, %v475
    %479 = vst [vmem:[#allocation6] sm:$0xff] %v468
    %480 = vst [vmem:[#allocation6 + $0x8] sm:$0xf] %v476
    %v481 = vsub.f32 %v24, %v468
    %v482 = vsub.f32 %v25, %v476
    %483 = vst [vmem:[#allocation5] sm:$0xff] %v481
    %484 = vst [vmem:[#allocation5 + $0x8] sm:$0xf] %v482
    // Predicated region
    $region10: #{tpu_custom_call.1} parent=1 // pred_check
      _
    $region11: #{tpu_custom_call.1} parent=1 // pred_check_branch
      %486 = sbr.rel (0) target = $region13
    $region12: #{tpu_custom_call.1} parent=1 // pred_region
      %s488 = ssub.s32 192, 192
      %489 = vsyncadd [#allocation4], %s488
      %s491 = sshll.u32 [#allocation5], 4
      %s492 = int_to_ptr.vmem [resolvable:$true] %s491
      %494 = dma.vmem_to_hbm [thread:$0]  %s492, 192, %s1, [#allocation4]
    $region13: #{tpu_custom_call.1} parent=1 // pred_fallthru
      _
    // Predicated region
    $region14: #{tpu_custom_call.1} parent=1 // pred_check
      _
    $region15: #{tpu_custom_call.1} parent=1 // pred_check_branch
      %496 = sbr.rel (0) target = $region17
    $region16: #{tpu_custom_call.1} parent=1 // pred_region
      %s498 = ssub.s32 192, 192
      %499 = vsyncadd [#allocation7], %s498
      %s501 = sshll.u32 [#allocation6], 4
      %s502 = int_to_ptr.vmem [resolvable:$true] %s501
      %504 = dma.vmem_to_hbm [thread:$0]  %s502, 192, %s2, [#allocation7]
    $region17: #{tpu_custom_call.1} parent=1 // pred_fallthru
      _
    // Predicated region
    $region18: #{tpu_custom_call.1} parent=1 // pred_check
      _
    $region19: #{tpu_custom_call.1} parent=1 // pred_check_branch
      %506 = sbr.rel (0) target = $region21
    $region20: #{tpu_custom_call.1} parent=1 // pred_region
      %507 = dma.done [#allocation4], 192
    $region21: #{tpu_custom_call.1} parent=1 // pred_fallthru
      _
    // Predicated region
    $region22: #{tpu_custom_call.1} parent=1 // pred_check
      _
    $region23: #{tpu_custom_call.1} parent=1 // pred_check_branch
      %509 = sbr.rel (0) target = $region25
    $region24: #{tpu_custom_call.1} parent=1 // pred_region
      %510 = dma.done [#allocation7], 192
    $region25: #{tpu_custom_call.1} parent=1 // pred_fallthru
      _
    %511 = vsyncpa [#allocation3], 1
    %512 = vsyncpa [#allocation4], 1
    %513 = vsyncpa [#allocation7], 1

</llo_original>
